<compile_context>
chip_gen: v7x
topology: tpu7x:2x2x1
jax: 0.10.0
libtpu: 0.0.40
codegen_flags: <defaults>
</compile_context>

<pallas_src>
import functools

import jax
import jax.numpy as jnp
from jax.experimental import pallas as pl
from jax.experimental.pallas import tpu as pltpu


# Finite "minus infinity" used only for masking the ragged lane tail of a class chunk.
# exp(_NEG_PAD / T) underflows to exactly 0 for any realistic temperature (T < ~1e28).
_NEG_PAD = -1e30

_C_TILE = 4096  # class-chunk width (lanes) when the class axis must be tiled


def _round_up(x, m):
    return (x + m - 1) // m * m


def _vmem_bytes_physical():
    try:
        return int(pltpu.get_tpu_info().vmem_capacity_bytes)
    except Exception:
        return 64 * 1024 * 1024  # conservative: assume v7x (64 MiB per TensorCore)


def _vmem_limit_bytes():
    # Scoped VMEM limit passed to the compiler: 3/4 of physical, capped at 100 MiB.
    phys = _vmem_bytes_physical()
    return int(min((phys * 3) // 4, 100 * 1024 * 1024))


def _choose_tb(c_lanes, itemsize, vmem_limit):
    """Rows per batch tile for a class-chunk of `c_lanes` lanes.

    Residency model per (row x chunk):
      * inputs are double-buffered by the BlockSpec pipeline: 2 arrays x 2 buffers
        x itemsize bytes,
      * ~5 live single-buffered f32 full-width temporaries inside the kernel
        (x, t, exp(x), exp(t), exp(t)*(t-x)).
    Budget is 3/4 of the scoped VMEM limit we actually request (headroom for the
    compiler's own scratch / semaphores).
    """
    budget = (vmem_limit * 3) // 4
    per_row = c_lanes * (2 * 2 * itemsize + 5 * 4)
    tb = budget // max(per_row, 1)
    return int(max(8, min(2048, (tb // 8) * 8)))


def _plan_tiles(B, C, itemsize, vmem_limit, tb=None, tc=None):
    b8 = _round_up(max(B, 1), 8)
    c_lanes = _round_up(C, 128)
    if tc is None:
        # Prefer full-C rows (single inner step; compiler masks the ragged lane tail).
        # Tile the class axis only when full-C rows would force tiny batch tiles
        # (huge vocab), which matters most on v7x's 64 MiB VMEM.
        full_tb = _choose_tb(c_lanes, itemsize, vmem_limit)
        tc = C if full_tb >= min(256, b8) else _C_TILE
    tc = int(tc)
    if tc >= C:
        tc = C                                 # single full-C chunk
    else:
        tc = max(128, _round_up(tc, 128))      # lane-aligned class chunks
    if tb is None:
        tb = _choose_tb(c_lanes if tc == C else tc, itemsize, vmem_limit)
    tb = max(8, (int(tb) // 8) * 8)
    tb = min(tb, b8)
    return tb, tc


def _kd_loss_kernel(x_ref, t_ref, o_ref, m_x, s_x, m_t, s_t, w_acc, *,
                    inv_temp, c_total, tc, need_lane_mask):
    """Online-logsumexp KD-KL over class chunks.

    Per row (a = x/T student, b = t/T teacher):
        KL = sum_j softmax(b)_j * (b_j - a_j) + lse(a) - lse(b)
    accumulated chunk-by-chunk with flash-style max rescaling.  Running maxes are kept
    in *raw* logit space; inv_temp is applied inside the exp arguments and on the
    (tb,1)-level sums only (no scaled full-tile copy of the logits).
    """
    ci = pl.program_id(1)
    nc = pl.num_programs(1)

    @pl.when(ci == 0)
    def _init():
        neg_inf = jnp.full(m_x.shape, -jnp.inf, dtype=jnp.float32)
        m_x[...] = neg_inf
        m_t[...] = neg_inf
        s_x[...] = jnp.zeros(s_x.shape, jnp.float32)
        s_t[...] = jnp.zeros(s_t.shape, jnp.float32)
        w_acc[...] = jnp.zeros(w_acc.shape, jnp.float32)

    x = x_ref[...].astype(jnp.float32)
    t = t_ref[...].astype(jnp.float32)
    if need_lane_mask:
        # Last class chunk extends past C: neutralize the out-of-range lanes so they
        # contribute exactly 0 to every row reduction.
        lane = ci * tc + jax.lax.broadcasted_iota(jnp.int32, x.shape, 1)
        valid = lane < c_total
        x = jnp.where(valid, x, _NEG_PAD)
        t = jnp.where(valid, t, _NEG_PAD)

    mx_new = jnp.maximum(m_x[...], jnp.max(x, axis=1, keepdims=True))
    mt_new = jnp.maximum(m_t[...], jnp.max(t, axis=1, keepdims=True))

    ex = jnp.exp((x - mx_new) * inv_temp)
    et = jnp.exp((t - mt_new) * inv_temp)

    ax = jnp.exp((m_x[...] - mx_new) * inv_temp)   # (tb,1) rescale factors
    at = jnp.exp((m_t[...] - mt_new) * inv_temp)

    s_x[...] = ax * s_x[...] + jnp.sum(ex, axis=1, keepdims=True)
    s_t[...] = at * s_t[...] + jnp.sum(et, axis=1, keepdims=True)
    # sum_j exp(b_j - m_b) * (b_j - a_j); the 1/T factor is applied on the (tb,1) sum.
    w_acc[...] = at * w_acc[...] + inv_temp * jnp.sum(et * (t - x), axis=1,
                                                      keepdims=True)
    m_x[...] = mx_new
    m_t[...] = mt_new

    @pl.when(ci == nc - 1)
    def _finalize():
        lse_x = m_x[...] * inv_temp + jnp.log(s_x[...])
        lse_t = m_t[...] * inv_temp + jnp.log(s_t[...])
        kl = w_acc[...] * pl.reciprocal(s_t[...], approx=True) + lse_x - lse_t
        o_ref[...] = kl.astype(o_ref.dtype)


def kd_loss(input_logits, target_logits, temp_factor, *, tb=None, tc=None):
    """Pallas implementation of KDLoss.forward(input, target) -> scalar loss.

    Note: `temp_factor` is baked in at trace time (static Python number), matching the
    PyTorch module attribute; a traced/jnp temperature is not supported.
    """
    assert input_logits.shape == target_logits.shape
    assert input_logits.ndim == 2
    assert float(temp_factor) > 0.0
    B, C = input_logits.shape

    itemsize = jnp.dtype(input_logits.dtype).itemsize
    vmem_limit = _vmem_limit_bytes()
    tb, tc = _plan_tiles(B, C, itemsize, vmem_limit, tb=tb, tc=tc)

    nb = pl.cdiv(B, tb)
    nc = pl.cdiv(C, tc)
    need_lane_mask = (tc != C) and (C % tc != 0)

    kernel = functools.partial(
        _kd_loss_kernel,
        inv_temp=1.0 / float(temp_factor),
        c_total=C,
        tc=tc,
        need_lane_mask=need_lane_mask,
    )

    per_row_kl = pl.pallas_call(
        kernel,
        out_shape=jax.ShapeDtypeStruct((B, 1), jnp.float32),
        grid_spec=pltpu.PrefetchScalarGridSpec(
            num_scalar_prefetch=0,
            grid=(nb, nc),
            in_specs=[
                pl.BlockSpec((tb, tc), lambda i, ci: (i, ci)),
                pl.BlockSpec((tb, tc), lambda i, ci: (i, ci)),
            ],
            out_specs=pl.BlockSpec((tb, 1), lambda i, ci: (i, 0)),
            scratch_shapes=[pltpu.VMEM((tb, 1), jnp.float32)] * 5,
        ),
        compiler_params=pltpu.CompilerParams(
            # Batch axis parallel (shards across the two TensorCores on v7x),
            # class-chunk axis is a carried reduction -> arbitrary.
            dimension_semantics=("parallel", "arbitrary"),
            vmem_limit_bytes=vmem_limit,
        ),
    )(input_logits, target_logits)

    # Out-of-range rows of the last partial batch tile were never written (masked OOB
    # store), so summing the (B,1) result is exact.  Tiny f32 reduction + scaling in XLA.
    return jnp.sum(per_row_kl) * (float(temp_factor) ** 2) / B


def _kd_loss_ref(input_logits, target_logits, temp_factor):
    # Pure-JAX reference mirroring the PyTorch semantics.
    x = input_logits.astype(jnp.float32) / temp_factor
    t = target_logits.astype(jnp.float32) / temp_factor
    log_p = jax.nn.log_softmax(x, axis=1)
    q = jax.nn.softmax(t, axis=1)
    log_q = jax.nn.log_softmax(t, axis=1)
    kl = jnp.sum(q * (log_q - log_p))
    return kl * (temp_factor ** 2) / input_logits.shape[0]


if __name__ == "__main__":
    key = jax.random.PRNGKey(0)
    k1, k2, k3, k4, k5, k6 = jax.random.split(key, 6)

    # 1) Tiny f32 case: single grid step, ragged class dim (32) handled by the compiler.
    B1, C1, T1 = 8, 32, 4.0
    x1 = jax.random.normal(k1, (B1, C1), dtype=jnp.float32)
    t1 = jax.random.normal(k2, (B1, C1), dtype=jnp.float32)
    out1 = jax.block_until_ready(kd_loss(x1, t1, T1))
    ref1 = _kd_loss_ref(x1, t1, T1)
    assert jnp.allclose(out1, ref1, rtol=2e-3, atol=2e-3), (out1, ref1)

    # 2) bf16 ingress + batch remainder without padding (B=20 not a multiple of tb=8),
    #    full-C chunks with a ragged lane tail (C=200).
    B2, C2, T2 = 20, 200, 2.0
    x2 = (jax.random.normal(k3, (B2, C2)) * 2.0).astype(jnp.bfloat16)
    t2 = (jax.random.normal(k4, (B2, C2)) * 2.0).astype(jnp.bfloat16)
    out2 = jax.block_until_ready(kd_loss(x2, t2, T2, tb=8))
    ref2 = _kd_loss_ref(x2, t2, T2)
    assert jnp.allclose(out2, ref2, rtol=2e-3, atol=2e-3), (out2, ref2)

    # 3) Forced class-axis tiling: online logsumexp across 2 class chunks with a masked
    #    ragged tail (exercises the big-vocab v7x code path at small shapes).
    B3, C3, T3 = 24, 200, 3.0
    x3 = jax.random.normal(k5, (B3, C3), dtype=jnp.float32) * 1.5
    t3 = jax.random.normal(k6, (B3, C3), dtype=jnp.float32) * 1.5
    out3 = jax.block_until_ready(kd_loss(x3, t3, T3, tb=8, tc=128))
    ref3 = _kd_loss_ref(x3, t3, T3)
    assert jnp.allclose(out3, ref3, rtol=2e-3, atol=2e-3), (out3, ref3)

    print("KERNEL_OK")
</pallas_src>

<mosaic_0001>
module attributes {stable_mosaic.version = 11 : i64} {
  func.func @_kd_loss_kernel(%arg0: i32, %arg1: i32, %arg2: memref<8x32xf32, #tpu.memory_space<vmem>>, %arg3: memref<8x32xf32, #tpu.memory_space<vmem>>, %arg4: memref<8x1xf32, #tpu.memory_space<vmem>>, %arg5: memref<8x1xf32, #tpu.memory_space<vmem>>, %arg6: memref<8x1xf32, #tpu.memory_space<vmem>>, %arg7: memref<8x1xf32, #tpu.memory_space<vmem>>, %arg8: memref<8x1xf32, #tpu.memory_space<vmem>>, %arg9: memref<8x1xf32, #tpu.memory_space<vmem>>) attributes {dimension_semantics = [#tpu.dimension_semantics<parallel>, #tpu.dimension_semantics<arbitrary>], iteration_bounds = array<i64: 1, 1>, scalar_prefetch = 0 : i64, scratch_operands = 5 : i64, tpu.core_type = #tpu.core_type<tc>, window_params = [{transform_indices = @transform_0, window_bounds = array<i64: 8, 32>}, {transform_indices = @transform_1, window_bounds = array<i64: 8, 32>}, {transform_indices = @transform_2, window_bounds = array<i64: 8, 1>}]} {
    %c0_i32 = arith.constant 0 : i32
    %0 = arith.cmpi eq, %arg1, %c0_i32 : i32
    %1 = arith.extui %0 : i1 to i32
    %c0_i32_0 = arith.constant 0 : i32
    %2 = arith.cmpi ne, %1, %c0_i32_0 : i32
    scf.if %2 {
      %cst_39 = arith.constant 0xFF800000 : f32
      %60 = vector.broadcast %cst_39 : f32 to vector<8x1xf32>
      %c0_40 = arith.constant 0 : index
      %c0_41 = arith.constant 0 : index
      %61 = vector.load %arg5[%c0_40, %c0_41] : memref<8x1xf32, #tpu.memory_space<vmem>>, vector<8x1xf32>
      tpu.vector_store %arg5[%c0_40, %c0_41], %60 {strides = array<i32>} : memref<8x1xf32, #tpu.memory_space<vmem>>, vector<8x1xf32>,
      %c0_42 = arith.constant 0 : index
      %c0_43 = arith.constant 0 : index
      %62 = vector.load %arg7[%c0_42, %c0_43] : memref<8x1xf32, #tpu.memory_space<vmem>>, vector<8x1xf32>
      tpu.vector_store %arg7[%c0_42, %c0_43], %60 {strides = array<i32>} : memref<8x1xf32, #tpu.memory_space<vmem>>, vector<8x1xf32>,
      %cst_44 = arith.constant 0.000000e+00 : f32
      %63 = vector.broadcast %cst_44 : f32 to vector<8x1xf32>
      %c0_45 = arith.constant 0 : index
      %c0_46 = arith.constant 0 : index
      %64 = vector.load %arg6[%c0_45, %c0_46] : memref<8x1xf32, #tpu.memory_space<vmem>>, vector<8x1xf32>
      tpu.vector_store %arg6[%c0_45, %c0_46], %63 {strides = array<i32>} : memref<8x1xf32, #tpu.memory_space<vmem>>, vector<8x1xf32>,
      %cst_47 = arith.constant 0.000000e+00 : f32
      %65 = vector.broadcast %cst_47 : f32 to vector<8x1xf32>
      %c0_48 = arith.constant 0 : index
      %c0_49 = arith.constant 0 : index
      %66 = vector.load %arg8[%c0_48, %c0_49] : memref<8x1xf32, #tpu.memory_space<vmem>>, vector<8x1xf32>
      tpu.vector_store %arg8[%c0_48, %c0_49], %65 {strides = array<i32>} : memref<8x1xf32, #tpu.memory_space<vmem>>, vector<8x1xf32>,
      %cst_50 = arith.constant 0.000000e+00 : f32
      %67 = vector.broadcast %cst_50 : f32 to vector<8x1xf32>
      %c0_51 = arith.constant 0 : index
      %c0_52 = arith.constant 0 : index
      %68 = vector.load %arg9[%c0_51, %c0_52] : memref<8x1xf32, #tpu.memory_space<vmem>>, vector<8x1xf32>
      tpu.vector_store %arg9[%c0_51, %c0_52], %67 {strides = array<i32>} : memref<8x1xf32, #tpu.memory_space<vmem>>, vector<8x1xf32>,
    } else {
    }
    %c0 = arith.constant 0 : index
    %c0_1 = arith.constant 0 : index
    %3 = vector.load %arg2[%c0, %c0_1] : memref<8x32xf32, #tpu.memory_space<vmem>>, vector<8x32xf32>
    %c0_2 = arith.constant 0 : index
    %c0_3 = arith.constant 0 : index
    %4 = vector.load %arg3[%c0_2, %c0_3] : memref<8x32xf32, #tpu.memory_space<vmem>>, vector<8x32xf32>
    %c0_4 = arith.constant 0 : index
    %c0_5 = arith.constant 0 : index
    %5 = vector.load %arg5[%c0_4, %c0_5] : memref<8x1xf32, #tpu.memory_space<vmem>>, vector<8x1xf32>
    %cst = arith.constant dense<0xFF800000> : vector<8xf32>
    %6 = vector.multi_reduction <maximumf>, %3, %cst [1] : vector<8x32xf32> to vector<8xf32>
    %7 = vector.shape_cast %6 : vector<8xf32> to vector<8x1xf32>
    %8 = arith.maximumf %5, %7 : vector<8x1xf32>
    %c0_6 = arith.constant 0 : index
    %c0_7 = arith.constant 0 : index
    %9 = vector.load %arg7[%c0_6, %c0_7] : memref<8x1xf32, #tpu.memory_space<vmem>>, vector<8x1xf32>
    %cst_8 = arith.constant dense<0xFF800000> : vector<8xf32>
    %10 = vector.multi_reduction <maximumf>, %4, %cst_8 [1] : vector<8x32xf32> to vector<8xf32>
    %11 = vector.shape_cast %10 : vector<8xf32> to vector<8x1xf32>
    %12 = arith.maximumf %9, %11 : vector<8x1xf32>
    %13 = vector.broadcast %8 : vector<8x1xf32> to vector<8x32xf32>
    %14 = arith.subf %3, %13 : vector<8x32xf32>
    %cst_9 = arith.constant 2.500000e-01 : f32
    %15 = vector.broadcast %cst_9 : f32 to vector<8x32xf32>
    %16 = arith.mulf %14, %15 : vector<8x32xf32>
    %17 = math.exp %16 : vector<8x32xf32>
    %18 = vector.broadcast %12 : vector<8x1xf32> to vector<8x32xf32>
    %19 = arith.subf %4, %18 : vector<8x32xf32>
    %cst_10 = arith.constant 2.500000e-01 : f32
    %20 = vector.broadcast %cst_10 : f32 to vector<8x32xf32>
    %21 = arith.mulf %19, %20 : vector<8x32xf32>
    %22 = math.exp %21 : vector<8x32xf32>
    %c0_11 = arith.constant 0 : index
    %c0_12 = arith.constant 0 : index
    %23 = vector.load %arg5[%c0_11, %c0_12] : memref<8x1xf32, #tpu.memory_space<vmem>>, vector<8x1xf32>
    %24 = arith.subf %23, %8 : vector<8x1xf32>
    %cst_13 = arith.constant 2.500000e-01 : f32
    %25 = vector.broadcast %cst_13 : f32 to vector<8x1xf32>
    %26 = arith.mulf %24, %25 : vector<8x1xf32>
    %27 = math.exp %26 : vector<8x1xf32>
    %c0_14 = arith.constant 0 : index
    %c0_15 = arith.constant 0 : index
    %28 = vector.load %arg7[%c0_14, %c0_15] : memref<8x1xf32, #tpu.memory_space<vmem>>, vector<8x1xf32>
    %29 = arith.subf %28, %12 : vector<8x1xf32>
    %cst_16 = arith.constant 2.500000e-01 : f32
    %30 = vector.broadcast %cst_16 : f32 to vector<8x1xf32>
    %31 = arith.mulf %29, %30 : vector<8x1xf32>
    %32 = math.exp %31 : vector<8x1xf32>
    %c0_17 = arith.constant 0 : index
    %c0_18 = arith.constant 0 : index
    %33 = vector.load %arg6[%c0_17, %c0_18] : memref<8x1xf32, #tpu.memory_space<vmem>>, vector<8x1xf32>
    %34 = arith.mulf %27, %33 : vector<8x1xf32>
    %cst_19 = arith.constant dense<0.000000e+00> : vector<8xf32>
    %35 = vector.multi_reduction <add>, %17, %cst_19 [1] : vector<8x32xf32> to vector<8xf32>
    %36 = vector.shape_cast %35 : vector<8xf32> to vector<8x1xf32>
    %37 = arith.addf %34, %36 : vector<8x1xf32>
    %c0_20 = arith.constant 0 : index
    %c0_21 = arith.constant 0 : index
    %38 = vector.load %arg6[%c0_20, %c0_21] : memref<8x1xf32, #tpu.memory_space<vmem>>, vector<8x1xf32>
    tpu.vector_store %arg6[%c0_20, %c0_21], %37 {strides = array<i32>} : memref<8x1xf32, #tpu.memory_space<vmem>>, vector<8x1xf32>,
    %c0_22 = arith.constant 0 : index
    %c0_23 = arith.constant 0 : index
    %39 = vector.load %arg8[%c0_22, %c0_23] : memref<8x1xf32, #tpu.memory_space<vmem>>, vector<8x1xf32>
    %40 = arith.mulf %32, %39 : vector<8x1xf32>
    %cst_24 = arith.constant dense<0.000000e+00> : vector<8xf32>
    %41 = vector.multi_reduction <add>, %22, %cst_24 [1] : vector<8x32xf32> to vector<8xf32>
    %42 = vector.shape_cast %41 : vector<8xf32> to vector<8x1xf32>
    %43 = arith.addf %40, %42 : vector<8x1xf32>
    %c0_25 = arith.constant 0 : index
    %c0_26 = arith.constant 0 : index
    %44 = vector.load %arg8[%c0_25, %c0_26] : memref<8x1xf32, #tpu.memory_space<vmem>>, vector<8x1xf32>
    tpu.vector_store %arg8[%c0_25, %c0_26], %43 {strides = array<i32>} : memref<8x1xf32, #tpu.memory_space<vmem>>, vector<8x1xf32>,
    %c0_27 = arith.constant 0 : index
    %c0_28 = arith.constant 0 : index
    %45 = vector.load %arg9[%c0_27, %c0_28] : memref<8x1xf32, #tpu.memory_space<vmem>>, vector<8x1xf32>
    %46 = arith.mulf %32, %45 : vector<8x1xf32>
    %47 = arith.subf %4, %3 : vector<8x32xf32>
    %48 = arith.mulf %22, %47 : vector<8x32xf32>
    %cst_29 = arith.constant dense<0.000000e+00> : vector<8xf32>
    %49 = vector.multi_reduction <add>, %48, %cst_29 [1] : vector<8x32xf32> to vector<8xf32>
    %50 = vector.shape_cast %49 : vector<8xf32> to vector<8x1xf32>
    %cst_30 = arith.constant 2.500000e-01 : f32
    %51 = vector.broadcast %cst_30 : f32 to vector<8x1xf32>
    %52 = arith.mulf %51, %50 : vector<8x1xf32>
    %53 = arith.addf %46, %52 : vector<8x1xf32>
    %c0_31 = arith.constant 0 : index
    %c0_32 = arith.constant 0 : index
    %54 = vector.load %arg9[%c0_31, %c0_32] : memref<8x1xf32, #tpu.memory_space<vmem>>, vector<8x1xf32>
    tpu.vector_store %arg9[%c0_31, %c0_32], %53 {strides = array<i32>} : memref<8x1xf32, #tpu.memory_space<vmem>>, vector<8x1xf32>,
    %c0_33 = arith.constant 0 : index
    %c0_34 = arith.constant 0 : index
    %55 = vector.load %arg5[%c0_33, %c0_34] : memref<8x1xf32, #tpu.memory_space<vmem>>, vector<8x1xf32>
    tpu.vector_store %arg5[%c0_33, %c0_34], %8 {strides = array<i32>} : memref<8x1xf32, #tpu.memory_space<vmem>>, vector<8x1xf32>,
    %c0_35 = arith.constant 0 : index
    %c0_36 = arith.constant 0 : index
    %56 = vector.load %arg7[%c0_35, %c0_36] : memref<8x1xf32, #tpu.memory_space<vmem>>, vector<8x1xf32>
    tpu.vector_store %arg7[%c0_35, %c0_36], %12 {strides = array<i32>} : memref<8x1xf32, #tpu.memory_space<vmem>>, vector<8x1xf32>,
    %c0_i32_37 = arith.constant 0 : i32
    %57 = arith.cmpi eq, %arg1, %c0_i32_37 : i32
    %58 = arith.extui %57 : i1 to i32
    %c0_i32_38 = arith.constant 0 : i32
    %59 = arith.cmpi ne, %58, %c0_i32_38 : i32
    scf.if %59 {
      %c0_39 = arith.constant 0 : index
      %c0_40 = arith.constant 0 : index
      %60 = vector.load %arg5[%c0_39, %c0_40] : memref<8x1xf32, #tpu.memory_space<vmem>>, vector<8x1xf32>
      %cst_41 = arith.constant 2.500000e-01 : f32
      %61 = vector.broadcast %cst_41 : f32 to vector<8x1xf32>
      %62 = arith.mulf %60, %61 : vector<8x1xf32>
      %c0_42 = arith.constant 0 : index
      %c0_43 = arith.constant 0 : index
      %63 = vector.load %arg6[%c0_42, %c0_43] : memref<8x1xf32, #tpu.memory_space<vmem>>, vector<8x1xf32>
      %64 = math.log %63 : vector<8x1xf32>
      %65 = arith.addf %62, %64 : vector<8x1xf32>
      %c0_44 = arith.constant 0 : index
      %c0_45 = arith.constant 0 : index
      %66 = vector.load %arg7[%c0_44, %c0_45] : memref<8x1xf32, #tpu.memory_space<vmem>>, vector<8x1xf32>
      %cst_46 = arith.constant 2.500000e-01 : f32
      %67 = vector.broadcast %cst_46 : f32 to vector<8x1xf32>
      %68 = arith.mulf %66, %67 : vector<8x1xf32>
      %c0_47 = arith.constant 0 : index
      %c0_48 = arith.constant 0 : index
      %69 = vector.load %arg8[%c0_47, %c0_48] : memref<8x1xf32, #tpu.memory_space<vmem>>, vector<8x1xf32>
      %70 = math.log %69 : vector<8x1xf32>
      %71 = arith.addf %68, %70 : vector<8x1xf32>
      %c0_49 = arith.constant 0 : index
      %c0_50 = arith.constant 0 : index
      %72 = vector.load %arg9[%c0_49, %c0_50] : memref<8x1xf32, #tpu.memory_space<vmem>>, vector<8x1xf32>
      %c0_51 = arith.constant 0 : index
      %c0_52 = arith.constant 0 : index
      %73 = vector.load %arg8[%c0_51, %c0_52] : memref<8x1xf32, #tpu.memory_space<vmem>>, vector<8x1xf32>
      %74 = tpu.reciprocal %73 {approx = true} : vector<8x1xf32> -> vector<8x1xf32>
      %75 = arith.mulf %72, %74 : vector<8x1xf32>
      %76 = arith.addf %75, %65 : vector<8x1xf32>
      %77 = arith.subf %76, %71 : vector<8x1xf32>
      %c0_53 = arith.constant 0 : index
      %c0_54 = arith.constant 0 : index
      %78 = vector.load %arg4[%c0_53, %c0_54] : memref<8x1xf32, #tpu.memory_space<vmem>>, vector<8x1xf32>
      tpu.vector_store %arg4[%c0_53, %c0_54], %77 {strides = array<i32>} : memref<8x1xf32, #tpu.memory_space<vmem>>, vector<8x1xf32>,
    } else {
    }
    return
  }
  func.func @transform_0(%arg0: i32, %arg1: i32) -> (i32, i32) {
    %c0_i32 = arith.constant 0 : i32
    return %arg0, %arg1 : i32, i32
  }
  func.func @transform_1(%arg0: i32, %arg1: i32) -> (i32, i32) {
    %c0_i32 = arith.constant 0 : i32
    return %arg0, %arg1 : i32, i32
  }
  func.func @transform_2(%arg0: i32, %arg1: i32) -> (i32, i32) {
    %c0_i32 = arith.constant 0 : i32
    %c0_i32_0 = arith.constant 0 : i32
    return %arg0, %c0_i32 : i32, i32
  }
}

</mosaic_0001>

<llo_original>
// kernel: tpu_custom_call.1
$region0: #{tpu_custom_call.1}
  #allocation0 [shape = 'u32[]', space=smem, size = 0x4, offset = 0x4, fixed_abs, tag = 'smem constant byte address 0x4 - core index']
  #allocation1 [shape = 'u32[144,128]{1,0:T(1,128)}', space=vmem, size = 0x12000, scoped, tag = 'internal scratch']
  #allocation2 [shape = 'f32[8,1]{1,0:T(8,128)}', space=vmem, size = 0x1000, scoped, tag = 'scratch operand']
  #allocation3 [shape = 'f32[8,1]{1,0:T(8,128)}', space=vmem, size = 0x1000, scoped, tag = 'scratch operand']
  #allocation4 [shape = 'f32[8,1]{1,0:T(8,128)}', space=vmem, size = 0x1000, scoped, tag = 'scratch operand']
  #allocation5 [shape = 'f32[8,1]{1,0:T(8,128)}', space=vmem, size = 0x1000, scoped, tag = 'scratch operand']
  #allocation6 [shape = 'f32[8,1]{1,0:T(8,128)}', space=vmem, size = 0x1000, scoped, tag = 'scratch operand']
  %s0 = inlined_call_operand.hbm [shape: f32[8,32], index: 0, kind: input, shape index: {}]
  %s1 = inlined_call_operand.hbm [shape: f32[8,32], index: 1, kind: input, shape index: {}]
  %s2 = inlined_call_operand.vmem [shape: f32[8,1], index: 2, kind: output, shape index: {}]
  %s3 = sld [smem:[#allocation0]]
  $region34: #{tpu_custom_call.1} parent=0
    _
  %s5 = ssub.s32 1, %s3
  %s6 = scalar_select 0, %s5, %s3
  $region1: #{tpu_custom_call.1} parent=0
    #allocation7 [shape = 'u8[4096]{0}', space=vmem, size = 0x1000, scoped, tag = 'input window, operand 0, single buffered']
    #allocation8 [shape = 's32[1]{0}', space=sflag, size = 0x4, scoped, tag = 'scoped memory for tpu_custom_call.1']
    #allocation9 [shape = 'u8[4096]{0}', space=vmem, size = 0x1000, scoped, tag = 'input window, operand 1, single buffered']
    #allocation10 [shape = 's32[1]{0}', space=sflag, size = 0x4, scoped, tag = 'scoped memory for tpu_custom_call.1']
    %7 = vsyncpa [#allocation8], 0
    %8 = vsyncpa [#allocation10], 0
    // Predicated region
    $region2: #{tpu_custom_call.1} parent=1 // pred_check
      _
    $region3: #{tpu_custom_call.1} parent=1 // pred_check_branch
      %10 = sbr.rel (0) target = $region5
    $region4: #{tpu_custom_call.1} parent=1 // pred_region
      %s12 = ssub.s32 128, 128
      %13 = vsyncadd [#allocation8], %s12
      %s15 = sshll.u32 [#allocation7], 4
      %s16 = int_to_ptr.vmem [resolvable:$true] %s15
      %18 = dma.hbm_to_vmem [thread:$0]  %s0, 128, %s16, [#allocation8]
    $region5: #{tpu_custom_call.1} parent=1 // pred_fallthru
      _
    // Predicated region
    $region6: #{tpu_custom_call.1} parent=1 // pred_check
      _
    $region7: #{tpu_custom_call.1} parent=1 // pred_check_branch
      %20 = sbr.rel (0) target = $region9
    $region8: #{tpu_custom_call.1} parent=1 // pred_region
      %s22 = ssub.s32 128, 128
      %23 = vsyncadd [#allocation10], %s22
      %s25 = sshll.u32 [#allocation9], 4
      %s26 = int_to_ptr.vmem [resolvable:$true] %s25
      %28 = dma.hbm_to_vmem [thread:$0]  %s1, 128, %s26, [#allocation10]
    $region9: #{tpu_custom_call.1} parent=1 // pred_fallthru
      _
    // Predicated region
    $region10: #{tpu_custom_call.1} parent=1 // pred_check
      _
    $region11: #{tpu_custom_call.1} parent=1 // pred_check_branch
      %30 = sbr.rel (0) target = $region13
    $region12: #{tpu_custom_call.1} parent=1 // pred_region
      %31 = dma.done [#allocation8], 128
    $region13: #{tpu_custom_call.1} parent=1 // pred_fallthru
      _
    // Predicated region
    $region14: #{tpu_custom_call.1} parent=1 // pred_check
      _
    $region15: #{tpu_custom_call.1} parent=1 // pred_check_branch
      %33 = sbr.rel (0) target = $region17
    $region16: #{tpu_custom_call.1} parent=1 // pred_region
      %34 = dma.done [#allocation10], 128
    $region17: #{tpu_custom_call.1} parent=1 // pred_fallthru
      _
    %p35 = scmp.eq.s32.totalorder 0, 0
    // Predicated region
    $region18: #{tpu_custom_call.1} parent=1 // pred_check
      %p36 = pneg %p35
    $region19: #{tpu_custom_call.1} parent=1 // pred_check_branch
      %38 = sbr.rel (%p36) target = $region21
    $region20: #{tpu_custom_call.1} parent=1 // pred_region
      %vm39 = vcmask 7168
      %40 = vst.msk [vmem:[#allocation2] sm:$0xff] %vm39, -inf
      %41 = vst.msk [vmem:[#allocation4] sm:$0xff] %vm39, -inf
      %42 = vst.msk [vmem:[#allocation3] sm:$0xff] %vm39, 0.0
      %43 = vst.msk [vmem:[#allocation5] sm:$0xff] %vm39, 0.0
      %44 = vst.msk [vmem:[#allocation6] sm:$0xff] %vm39, 0.0
    $region21: #{tpu_custom_call.1} parent=1 // pred_fallthru
      _
    %v45 = vld [vmem:[#allocation7] sm:$0xff]
    %v46 = vld [vmem:[#allocation9] sm:$0xff]
    %v47 = vld [vmem:[#allocation2] sm:$0xff]
    %vm48 = vcmask 261120
    %v49 = vsel %vm48, %v45, -inf
    %50 = vmax.xlane.f32.xlu0 %v49
    %v51 = vpop.xlane.xlu0 %50
    %v52 = vmax.f32 %v47, %v51
    %v53 = vld [vmem:[#allocation4] sm:$0xff]
    %v54 = vsel %vm48, %v46, -inf
    %55 = vmax.xlane.f32.xlu0 %v54
    %v56 = vpop.xlane.xlu0 %55
    %v57 = vmax.f32 %v53, %v56
    %59 = vset.pattern.permute.xlu0 0
    %60 = vperm.xlu0 %59, %v52
    %v61 = vpop.permute.xlu0 %60
    %v63 = vsub.f32 %v45, %v61
    %v64 = vmul.f32 %v63, 0.25
    %v65 = vmul.f32 %v64, 1.442695
    %v66 = vpow.pop %v65
    %68 = vset.pattern.permute.xlu0 0
    %69 = vperm.xlu0 %68, %v57
    %v70 = vpop.permute.xlu0 %69
    %v72 = vsub.f32 %v46, %v70
    %v73 = vmul.f32 %v72, 0.25
    %v74 = vmul.f32 %v73, 1.442695
    %v75 = vpow.pop %v74
    %v76 = vsub.f32 %v47, %v52
    %v77 = vmul.f32 %v76, 0.25
    %v78 = vmul.f32 %v77, 1.442695
    %v79 = vpow.pop %v78
    %v80 = vsub.f32 %v53, %v57
    %v81 = vmul.f32 %v80, 0.25
    %v82 = vmul.f32 %v81, 1.442695
    %v83 = vpow.pop %v82
    %v84 = vld [vmem:[#allocation3] sm:$0xff]
    %v85 = vmul.f32 %v79, %v84
    %v86 = vsel %vm48, %v66, 0.0
    %87 = vadd.xlane.f32.xlu0 %v86
    %v88 = vpop.xlane.xlu0 %87
    %v89 = vadd.f32 %v85, %v88
    %vm90 = vcmask 7168
    %91 = vst.msk [vmem:[#allocation3] sm:$0xff] %vm90, %v89
    %v92 = vld [vmem:[#allocation5] sm:$0xff]
    %v93 = vmul.f32 %v83, %v92
    %v94 = vsel %vm48, %v75, 0.0
    %95 = vadd.xlane.f32.xlu0 %v94
    %v96 = vpop.xlane.xlu0 %95
    %v97 = vadd.f32 %v93, %v96
    %98 = vst.msk [vmem:[#allocation5] sm:$0xff] %vm90, %v97
    %v99 = vld [vmem:[#allocation6] sm:$0xff]
    %v100 = vmul.f32 %v83, %v99
    %v101 = vsub.f32 %v46, %v45
    %v102 = vmul.f32 %v75, %v101
    %v103 = vsel %vm48, %v102, 0.0
    %104 = vadd.xlane.f32.xlu0 %v103
    %v105 = vpop.xlane.xlu0 %104
    %v106 = vmul.f32 %v105, 0.25
    %v107 = vadd.f32 %v100, %v106
    %108 = vst.msk [vmem:[#allocation6] sm:$0xff] %vm90, %v107
    %109 = vst.msk [vmem:[#allocation2] sm:$0xff] %vm90, %v52
    %110 = vst.msk [vmem:[#allocation4] sm:$0xff] %vm90, %v57
    // Predicated region
    $region22: #{tpu_custom_call.1} parent=1 // pred_check
      %p111 = pneg %p35
    $region23: #{tpu_custom_call.1} parent=1 // pred_check_branch
      %113 = sbr.rel (%p111) target = $region25
    $region24: #{tpu_custom_call.1} parent=1 // pred_region
      %v114 = vld [vmem:[#allocation2] sm:$0xff]
      %v115 = vmul.f32 %v114, 0.25
      %v116 = vld [vmem:[#allocation3] sm:$0xff]
      %v117 = vlog2.pop %v116
      %v118 = vmul.f32 %v117, 0.6931472
      %v119 = vadd.f32 %v115, %v118
      %v120 = vld [vmem:[#allocation4] sm:$0xff]
      %v121 = vmul.f32 %v120, 0.25
      %v122 = vld [vmem:[#allocation5] sm:$0xff]
      %v123 = vlog2.pop %v122
      %v124 = vmul.f32 %v123, 0.6931472
      %v125 = vadd.f32 %v121, %v124
      %v126 = vld [vmem:[#allocation6] sm:$0xff]
      %v127 = vrcp.pop %v122
      %v128 = vmul.f32 %v126, %v127
      %v129 = vadd.f32 %v128, %v119
      %v130 = vsub.f32 %v129, %v125
      %131 = vst.msk [vmem:[%s2] sm:$0xff] %vm90, %v130
    $region25: #{tpu_custom_call.1} parent=1 // pred_fallthru
      _
    // Predicated region
    $region26: #{tpu_custom_call.1} parent=1 // pred_check
      _
    $region27: #{tpu_custom_call.1} parent=1 // pred_check_branch
      %133 = sbr.rel (0) target = $region29
    $region28: #{tpu_custom_call.1} parent=1 // pred_region
      _
    $region29: #{tpu_custom_call.1} parent=1 // pred_fallthru
      _
    // Predicated region
    $region30: #{tpu_custom_call.1} parent=1 // pred_check
      _
    $region31: #{tpu_custom_call.1} parent=1 // pred_check_branch
      %135 = sbr.rel (0) target = $region33
    $region32: #{tpu_custom_call.1} parent=1 // pred_region
      _
    $region33: #{tpu_custom_call.1} parent=1 // pred_fallthru
      _
    %136 = vsyncpa [#allocation8], 1
    %137 = vsyncpa [#allocation10], 1

</llo_original>
